<compile_context>
chip_gen: v5e
topology: v5e:2x2
jax: 0.10.0
libtpu: 0.0.40
codegen_flags: <defaults>
</compile_context>

<pallas_src>
import jax
import jax.numpy as jnp
import numpy as np
from jax import lax
from jax.experimental import pallas as pl
from jax.experimental.pallas import tpu as pltpu

# ---- problem sizes (small, consistent with the module) ----
B = 2          # batch
L = 8          # lookback (obs.shape[1])
S = 8          # stock_num (obs.shape[2]) == action_space.n
F = 16         # features_dim
HID = 64       # net_arch = [64, 64]
A = S          # action_dim (must equal S for the mask broadcast in _predict)
SELECTED = 4   # selected_num
OUT_PAD = 128  # lane-dense padded width of the action output


# ---------------------------------------------------------------------------
# Fused kernel: RNN last-hidden + mask + q_net MLP + masked_fill + top-k.
# ---------------------------------------------------------------------------
def dqn_fused_kernel(obs_ref, xt_ref, proj_ref, whhb_ref, w1b1_ref, w2b2_ref,
                     w3b3_ref, act_ref, q_ref):
    Bc, Lc, Sc = obs_ref.shape
    HIDc = w2b2_ref.shape[1]
    Ac = w3b3_ref.shape[1]
    OUTP = act_ref.shape[1]
    f32 = jnp.float32

    # ---- hoisted input projection: pre[t] for every step in one MXU matmul ----
    e_mat = proj_ref[0:Sc, :]                       # (S, S*F)  block-expanded wih
    b_rnn = proj_ref[Sc:Sc + 1, :]                  # (1, S*F)  tiled (bih + bhh)
    pre_all = jnp.dot(xt_ref[...], e_mat,
                      preferred_element_type=f32) + b_rnn      # (L*B, S*F)

    # ---- statically unrolled Elman recurrence, state lane-dense as (B, S*F) ----
    whhb = whhb_ref[...]                            # (S*F, S*F) block-diagonal whh
    h = jnp.tanh(pre_all[0:Bc, :])                  # t = 0 (h_prev = 0)
    for t in range(1, Lc):
        pre_t = pre_all[t * Bc:(t + 1) * Bc, :]     # static sublane slice (off the chain)
        h = jnp.tanh(pre_t + jnp.dot(h, whhb, preferred_element_type=f32))
    # h == Flatten(last_hidden.view(B, S, F)) : already the (B, S*F) feature slab

    # ---- q_net MLP: [S*F -> HID -> ReLU -> HID -> ReLU -> A] ----
    d_in = w1b1_ref.shape[0] - 1
    z = jnp.dot(h, w1b1_ref[0:d_in, :], preferred_element_type=f32) \
        + w1b1_ref[d_in:d_in + 1, :]
    z = jnp.maximum(z, 0.0)
    z = jnp.dot(z, w2b2_ref[0:HIDc, :], preferred_element_type=f32) \
        + w2b2_ref[HIDc:HIDc + 1, :]
    z = jnp.maximum(z, 0.0)
    q = jnp.dot(z, w3b3_ref[0:HIDc, :], preferred_element_type=f32) \
        + w3b3_ref[HIDc:HIDc + 1, :]                # (B, A)

    # ---- masked_fill(~mask, -inf): mask computed in-kernel from obs[0] ----
    obs0 = obs_ref[0]                               # (L, S)
    col_mag = jnp.max(jnp.abs(obs0), axis=0, keepdims=True)    # (1, S)
    valid = col_mag > 0.0                           # ~(column all zero)
    NEG_MASKED = jnp.float32(-1.0e38)               # finite stand-in for -inf
    NEG_TAKEN = jnp.float32(-2.0e38)                # below NEG_MASKED -> no index repeats
    qm = jnp.where(valid, q, NEG_MASKED)            # (B, A)
    q_ref[...] = qm

    # ---- top-SELECTED selection (descending; lowest index wins ties) ----
    col_ids = lax.broadcasted_iota(jnp.int32, (Bc, Ac), 1)
    col_f = col_ids.astype(f32)
    out_cols = lax.broadcasted_iota(jnp.int32, (Bc, OUTP), 1)
    result = jnp.zeros((Bc, OUTP), jnp.int32)
    qcur = qm
    for k in range(SELECTED):
        row_max = jnp.max(qcur, axis=1, keepdims=True)                    # (B, 1)
        is_max = qcur == row_max
        idx_f = jnp.min(jnp.where(is_max, col_f, jnp.float32(Ac)),
                        axis=1, keepdims=True)                            # (B, 1)
        idx = idx_f.astype(jnp.int32)
        result = jnp.where(out_cols == k, idx, result)                    # write column k
        qcur = jnp.where(col_ids == idx, NEG_TAKEN, qcur)                 # knock out winner
    act_ref[...] = result


def _vmem():
    return pl.BlockSpec(memory_space=pltpu.MemorySpace.VMEM)


# ---------------------------------------------------------------------------
# One-time packing of raw parameters into kernel-ready lane-dense tensors.
# ---------------------------------------------------------------------------
def pack_params(raw):
    wih = raw["wih"].reshape(1, F)
    bias_rnn = (raw["bih"] + raw["bhh"]).reshape(1, F)       # fold the two RNN biases
    eye_s = jnp.eye(S, dtype=jnp.float32)
    e_mat = jnp.kron(eye_s, wih)                             # (S, S*F): row s holds wih
    b_tile = jnp.tile(bias_rnn, (1, S))                      # (1, S*F)
    proj = jnp.concatenate([e_mat, b_tile], axis=0)          # (S+1, S*F)
    whhb = jnp.kron(eye_s, raw["whh"])                       # (S*F, S*F) block-diagonal
    w1b1 = jnp.concatenate([raw["w1"], raw["b1"]], axis=0)   # (S*F+1, HID)
    w2b2 = jnp.concatenate([raw["w2"], raw["b2"]], axis=0)   # (HID+1, HID)
    w3b3 = jnp.concatenate([raw["w3"], raw["b3"]], axis=0)   # (HID+1, A)
    return {"proj": proj, "whhb": whhb, "w1b1": w1b1, "w2b2": w2b2, "w3b3": w3b3}


# ---------------------------------------------------------------------------
# DQNPolicy.forward == _predict: q-values -> mask -> top-`selected_num` actions.
# Returns (actions, masked q-values); the module's forward output is `actions`.
# ---------------------------------------------------------------------------
@jax.jit
def dqn_policy_forward(obs, packed):
    b, l, s = obs.shape
    x = obs.reshape(b * s, l)                                # torch .reshape semantics
    # layout plumbing: rows [t*b, (t+1)*b) hold step t of every sequence
    xt = x.reshape(b, s, l).transpose(2, 0, 1).reshape(l * b, s)
    act_pad, q = pl.pallas_call(
        dqn_fused_kernel,
        out_shape=(jax.ShapeDtypeStruct((b, OUT_PAD), jnp.int32),
                   jax.ShapeDtypeStruct((b, A), jnp.float32)),
        in_specs=[_vmem()] * 7,
        out_specs=(_vmem(), _vmem()),
    )(obs, xt, packed["proj"], packed["whhb"],
      packed["w1b1"], packed["w2b2"], packed["w3b3"])
    return act_pad[:, :SELECTED], q


# ---------------------------------------------------------------------------
# Pure-JAX reference of the original module (for validation only).
# ---------------------------------------------------------------------------
def reference_forward(obs, raw):
    b, l, s = obs.shape
    x = obs.reshape(b * s, l)
    h = jnp.zeros((b * s, F), jnp.float32)
    for t in range(l):
        h = jnp.tanh(x[:, t:t + 1] * raw["wih"] + raw["bih"]
                     + h @ raw["whh"] + raw["bhh"])
    feat = h.reshape(b, s * F)
    z = jnp.maximum(feat @ raw["w1"] + raw["b1"], 0.0)
    z = jnp.maximum(z @ raw["w2"] + raw["b2"], 0.0)
    q = z @ raw["w3"] + raw["b3"]
    valid = ~jnp.all(obs[0] == 0.0, axis=0)
    q = jnp.where(valid[None, :], q, -jnp.inf)
    actions = jnp.argsort(-q, axis=1)[:, :SELECTED]
    return q, actions


# ---------------------------------------------------------------------------
# Deterministic parameter init (shapes from QNetwork.__init__ / create_mlp).
# ---------------------------------------------------------------------------
def init_params(key):
    ks = jax.random.split(key, 10)

    def unif(k, shape, fan_in):
        bound = 1.0 / jnp.sqrt(jnp.float32(fan_in))
        return jax.random.uniform(k, shape, jnp.float32, -bound, bound)

    return {
        # RNN(input_shape=1, hidden_dim=F)
        "wih": unif(ks[0], (1, F), F),
        "bih": unif(ks[1], (1, F), F),
        "whh": unif(ks[2], (F, F), F),
        "bhh": unif(ks[3], (1, F), F),
        # q_net = create_mlp(F * S, A, [64, 64], ReLU)
        "w1": unif(ks[4], (S * F, HID), S * F),
        "b1": unif(ks[5], (1, HID), S * F),
        "w2": unif(ks[6], (HID, HID), HID),
        "b2": unif(ks[7], (1, HID), HID),
        "w3": unif(ks[8], (HID, A), HID),
        "b3": unif(ks[9], (1, A), HID),
    }


if __name__ == "__main__":
    key = jax.random.PRNGKey(0)
    pkey, okey = jax.random.split(key)

    raw = init_params(pkey)
    packed = pack_params(raw)

    obs = jax.random.normal(okey, (B, L, S), dtype=jnp.float32)
    # Zero out one stock column in the first observation to exercise the masking path.
    obs = obs.at[0, :, 3].set(0.0)

    actions, q_kernel = dqn_policy_forward(obs, packed)
    actions = jax.block_until_ready(actions)

    # ---- validation against the pure-JAX reference ----
    q_ref, _ = reference_forward(obs, raw)
    valid_np = np.asarray(~jnp.all(obs[0] == 0.0, axis=0))
    q_k = np.asarray(q_kernel)
    q_r = np.asarray(q_ref)
    acts = np.asarray(actions)

    assert acts.shape == (B, SELECTED), acts.shape
    # masked stock (index 3) must never appear among selected top-k
    assert not bool(np.any(acts == 3)), acts
    # unmasked q-values must match the reference network
    assert np.allclose(q_k[:, valid_np], q_r[:, valid_np], atol=1e-3, rtol=1e-3), (q_k, q_r)
    # in-kernel top-k must equal descending argsort of the kernel's own q-values
    ref_rank = np.asarray(jnp.argsort(-q_kernel, axis=1)[:, :SELECTED])
    assert np.array_equal(acts, ref_rank), (acts, ref_rank)

    print("KERNEL_OK")
</pallas_src>

<mosaic_0001>
module attributes {stable_mosaic.version = 11 : i64} {
  func.func @dqn_fused_kernel(%arg0: memref<2x8x8xf32, #tpu.memory_space<vmem>>, %arg1: memref<16x8xf32, #tpu.memory_space<vmem>>, %arg2: memref<9x128xf32, #tpu.memory_space<vmem>>, %arg3: memref<128x128xf32, #tpu.memory_space<vmem>>, %arg4: memref<129x64xf32, #tpu.memory_space<vmem>>, %arg5: memref<65x64xf32, #tpu.memory_space<vmem>>, %arg6: memref<65x8xf32, #tpu.memory_space<vmem>>, %arg7: memref<2x128xi32, #tpu.memory_space<vmem>>, %arg8: memref<2x8xf32, #tpu.memory_space<vmem>>) attributes {dimension_semantics = [], scalar_prefetch = 0 : i64, scratch_operands = 0 : i64, tpu.core_type = #tpu.core_type<tc>} {
    %c0 = arith.constant 0 : index
    %c0_0 = arith.constant 0 : index
    %0 = vector.load %arg2[%c0, %c0_0] : memref<9x128xf32, #tpu.memory_space<vmem>>, vector<8x128xf32>
    %c8 = arith.constant 8 : index
    %c0_1 = arith.constant 0 : index
    %1 = vector.load %arg2[%c8, %c0_1] : memref<9x128xf32, #tpu.memory_space<vmem>>, vector<1x128xf32>
    %c0_2 = arith.constant 0 : index
    %c0_3 = arith.constant 0 : index
    %2 = vector.load %arg1[%c0_2, %c0_3] : memref<16x8xf32, #tpu.memory_space<vmem>>, vector<16x8xf32>
    %cst = arith.constant dense<0.000000e+00> : vector<16x128xf32>
    %3 = tpu.matmul %2, %0, %cst {dimension_numbers = #tpu.dot_dimension_numbers<[1], [0], [0], [1], [0, 0, 1, 1], [], []>} : vector<16x8xf32>, vector<8x128xf32>, vector<16x128xf32> -> vector<16x128xf32>
    %4 = vector.broadcast %1 : vector<1x128xf32> to vector<16x128xf32>
    %5 = arith.addf %3, %4 : vector<16x128xf32>
    %c0_4 = arith.constant 0 : index
    %c0_5 = arith.constant 0 : index
    %6 = vector.load %arg3[%c0_4, %c0_5] : memref<128x128xf32, #tpu.memory_space<vmem>>, vector<128x128xf32>
    %7 = vector.extract_strided_slice %5 {offsets = [0, 0], sizes = [2, 128], strides = [1, 1]} : vector<16x128xf32> to vector<2x128xf32>
    %8 = math.tanh %7 : vector<2x128xf32>
    %9 = vector.extract_strided_slice %5 {offsets = [2, 0], sizes = [2, 128], strides = [1, 1]} : vector<16x128xf32> to vector<2x128xf32>
    %cst_6 = arith.constant dense<0.000000e+00> : vector<2x128xf32>
    %10 = tpu.matmul %8, %6, %cst_6 {dimension_numbers = #tpu.dot_dimension_numbers<[1], [0], [0], [1], [0, 0, 1, 1], [], []>} : vector<2x128xf32>, vector<128x128xf32>, vector<2x128xf32> -> vector<2x128xf32>
    %11 = arith.addf %9, %10 : vector<2x128xf32>
    %12 = math.tanh %11 : vector<2x128xf32>
    %13 = vector.extract_strided_slice %5 {offsets = [4, 0], sizes = [2, 128], strides = [1, 1]} : vector<16x128xf32> to vector<2x128xf32>
    %cst_7 = arith.constant dense<0.000000e+00> : vector<2x128xf32>
    %14 = tpu.matmul %12, %6, %cst_7 {dimension_numbers = #tpu.dot_dimension_numbers<[1], [0], [0], [1], [0, 0, 1, 1], [], []>} : vector<2x128xf32>, vector<128x128xf32>, vector<2x128xf32> -> vector<2x128xf32>
    %15 = arith.addf %13, %14 : vector<2x128xf32>
    %16 = math.tanh %15 : vector<2x128xf32>
    %17 = vector.extract_strided_slice %5 {offsets = [6, 0], sizes = [2, 128], strides = [1, 1]} : vector<16x128xf32> to vector<2x128xf32>
    %cst_8 = arith.constant dense<0.000000e+00> : vector<2x128xf32>
    %18 = tpu.matmul %16, %6, %cst_8 {dimension_numbers = #tpu.dot_dimension_numbers<[1], [0], [0], [1], [0, 0, 1, 1], [], []>} : vector<2x128xf32>, vector<128x128xf32>, vector<2x128xf32> -> vector<2x128xf32>
    %19 = arith.addf %17, %18 : vector<2x128xf32>
    %20 = math.tanh %19 : vector<2x128xf32>
    %21 = vector.extract_strided_slice %5 {offsets = [8, 0], sizes = [2, 128], strides = [1, 1]} : vector<16x128xf32> to vector<2x128xf32>
    %cst_9 = arith.constant dense<0.000000e+00> : vector<2x128xf32>
    %22 = tpu.matmul %20, %6, %cst_9 {dimension_numbers = #tpu.dot_dimension_numbers<[1], [0], [0], [1], [0, 0, 1, 1], [], []>} : vector<2x128xf32>, vector<128x128xf32>, vector<2x128xf32> -> vector<2x128xf32>
    %23 = arith.addf %21, %22 : vector<2x128xf32>
    %24 = math.tanh %23 : vector<2x128xf32>
    %25 = vector.extract_strided_slice %5 {offsets = [10, 0], sizes = [2, 128], strides = [1, 1]} : vector<16x128xf32> to vector<2x128xf32>
    %cst_10 = arith.constant dense<0.000000e+00> : vector<2x128xf32>
    %26 = tpu.matmul %24, %6, %cst_10 {dimension_numbers = #tpu.dot_dimension_numbers<[1], [0], [0], [1], [0, 0, 1, 1], [], []>} : vector<2x128xf32>, vector<128x128xf32>, vector<2x128xf32> -> vector<2x128xf32>
    %27 = arith.addf %25, %26 : vector<2x128xf32>
    %28 = math.tanh %27 : vector<2x128xf32>
    %29 = vector.extract_strided_slice %5 {offsets = [12, 0], sizes = [2, 128], strides = [1, 1]} : vector<16x128xf32> to vector<2x128xf32>
    %cst_11 = arith.constant dense<0.000000e+00> : vector<2x128xf32>
    %30 = tpu.matmul %28, %6, %cst_11 {dimension_numbers = #tpu.dot_dimension_numbers<[1], [0], [0], [1], [0, 0, 1, 1], [], []>} : vector<2x128xf32>, vector<128x128xf32>, vector<2x128xf32> -> vector<2x128xf32>
    %31 = arith.addf %29, %30 : vector<2x128xf32>
    %32 = math.tanh %31 : vector<2x128xf32>
    %33 = vector.extract_strided_slice %5 {offsets = [14, 0], sizes = [2, 128], strides = [1, 1]} : vector<16x128xf32> to vector<2x128xf32>
    %cst_12 = arith.constant dense<0.000000e+00> : vector<2x128xf32>
    %34 = tpu.matmul %32, %6, %cst_12 {dimension_numbers = #tpu.dot_dimension_numbers<[1], [0], [0], [1], [0, 0, 1, 1], [], []>} : vector<2x128xf32>, vector<128x128xf32>, vector<2x128xf32> -> vector<2x128xf32>
    %35 = arith.addf %33, %34 : vector<2x128xf32>
    %36 = math.tanh %35 : vector<2x128xf32>
    %c0_13 = arith.constant 0 : index
    %c0_14 = arith.constant 0 : index
    %37 = vector.load %arg4[%c0_13, %c0_14] : memref<129x64xf32, #tpu.memory_space<vmem>>, vector<128x64xf32>
    %cst_15 = arith.constant dense<0.000000e+00> : vector<2x64xf32>
    %38 = tpu.matmul %36, %37, %cst_15 {dimension_numbers = #tpu.dot_dimension_numbers<[1], [0], [0], [1], [0, 0, 1, 1], [], []>} : vector<2x128xf32>, vector<128x64xf32>, vector<2x64xf32> -> vector<2x64xf32>
    %c128 = arith.constant 128 : index
    %c0_16 = arith.constant 0 : index
    %39 = vector.load %arg4[%c128, %c0_16] : memref<129x64xf32, #tpu.memory_space<vmem>>, vector<1x64xf32>
    %40 = vector.broadcast %39 : vector<1x64xf32> to vector<2x64xf32>
    %41 = arith.addf %38, %40 : vector<2x64xf32>
    %cst_17 = arith.constant 0.000000e+00 : f32
    %42 = vector.broadcast %cst_17 : f32 to vector<2x64xf32>
    %43 = arith.maximumf %41, %42 : vector<2x64xf32>
    %c0_18 = arith.constant 0 : index
    %c0_19 = arith.constant 0 : index
    %44 = vector.load %arg5[%c0_18, %c0_19] : memref<65x64xf32, #tpu.memory_space<vmem>>, vector<64x64xf32>
    %cst_20 = arith.constant dense<0.000000e+00> : vector<2x64xf32>
    %45 = tpu.matmul %43, %44, %cst_20 {dimension_numbers = #tpu.dot_dimension_numbers<[1], [0], [0], [1], [0, 0, 1, 1], [], []>} : vector<2x64xf32>, vector<64x64xf32>, vector<2x64xf32> -> vector<2x64xf32>
    %c64 = arith.constant 64 : index
    %c0_21 = arith.constant 0 : index
    %46 = vector.load %arg5[%c64, %c0_21] : memref<65x64xf32, #tpu.memory_space<vmem>>, vector<1x64xf32>
    %47 = vector.broadcast %46 : vector<1x64xf32> to vector<2x64xf32>
    %48 = arith.addf %45, %47 : vector<2x64xf32>
    %cst_22 = arith.constant 0.000000e+00 : f32
    %49 = vector.broadcast %cst_22 : f32 to vector<2x64xf32>
    %50 = arith.maximumf %48, %49 : vector<2x64xf32>
    %c0_23 = arith.constant 0 : index
    %c0_24 = arith.constant 0 : index
    %51 = vector.load %arg6[%c0_23, %c0_24] : memref<65x8xf32, #tpu.memory_space<vmem>>, vector<64x8xf32>
    %cst_25 = arith.constant dense<0.000000e+00> : vector<2x8xf32>
    %52 = tpu.matmul %50, %51, %cst_25 {dimension_numbers = #tpu.dot_dimension_numbers<[1], [0], [0], [1], [0, 0, 1, 1], [], []>} : vector<2x64xf32>, vector<64x8xf32>, vector<2x8xf32> -> vector<2x8xf32>
    %c64_26 = arith.constant 64 : index
    %c0_27 = arith.constant 0 : index
    %53 = vector.load %arg6[%c64_26, %c0_27] : memref<65x8xf32, #tpu.memory_space<vmem>>, vector<1x8xf32>
    %54 = vector.broadcast %53 : vector<1x8xf32> to vector<2x8xf32>
    %55 = arith.addf %52, %54 : vector<2x8xf32>
    %c0_28 = arith.constant 0 : index
    %c0_29 = arith.constant 0 : index
    %c0_30 = arith.constant 0 : index
    %56 = vector.load %arg0[%c0_28, %c0_29, %c0_30] : memref<2x8x8xf32, #tpu.memory_space<vmem>>, vector<1x8x8xf32>
    %57 = vector.shape_cast %56 : vector<1x8x8xf32> to vector<8x8xf32>
    %58 = math.absf %57 : vector<8x8xf32>
    %cst_31 = arith.constant dense<0xFF800000> : vector<8xf32>
    %59 = vector.multi_reduction <maximumf>, %58, %cst_31 [0] : vector<8x8xf32> to vector<8xf32>
    %60 = vector.shape_cast %59 : vector<8xf32> to vector<1x8xf32>
    %cst_32 = arith.constant 0.000000e+00 : f32
    %61 = vector.broadcast %cst_32 : f32 to vector<1x8xf32>
    %62 = arith.cmpf ogt, %60, %61 : vector<1x8xf32>
    %cst_33 = arith.constant -9.99999968E+37 : f32
    %63 = vector.shape_cast %62 : vector<1x8xi1> to vector<1x8xi1>
    %64 = vector.broadcast %63 : vector<1x8xi1> to vector<2x8xi1>
    %65 = vector.broadcast %cst_33 : f32 to vector<2x8xf32>
    %66 = arith.select %64, %55, %65 : vector<2x8xi1>, vector<2x8xf32>
    %c0_34 = arith.constant 0 : index
    %c0_35 = arith.constant 0 : index
    %67 = vector.load %arg8[%c0_34, %c0_35] : memref<2x8xf32, #tpu.memory_space<vmem>>, vector<2x8xf32>
    tpu.vector_store %arg8[%c0_34, %c0_35], %66 {strides = array<i32>} : memref<2x8xf32, #tpu.memory_space<vmem>>, vector<2x8xf32>,
    %68 = tpu.iota {dimensions = array<i32: 1>} : vector<2x8xi32>
    %69 = arith.sitofp %68 : vector<2x8xi32> to vector<2x8xf32>
    %70 = tpu.iota {dimensions = array<i32: 1>} : vector<2x128xi32>
    %c0_i32 = arith.constant 0 : i32
    %71 = vector.broadcast %c0_i32 : i32 to vector<2x128xi32>
    %cst_36 = arith.constant dense<0xFF800000> : vector<2xf32>
    %72 = vector.multi_reduction <maximumf>, %66, %cst_36 [1] : vector<2x8xf32> to vector<2xf32>
    %73 = vector.shape_cast %72 : vector<2xf32> to vector<2x1xf32>
    %74 = vector.broadcast %73 : vector<2x1xf32> to vector<2x8xf32>
    %75 = arith.cmpf oeq, %66, %74 : vector<2x8xf32>
    %cst_37 = arith.constant 8.000000e+00 : f32
    %76 = vector.broadcast %cst_37 : f32 to vector<2x8xf32>
    %77 = arith.select %75, %69, %76 : vector<2x8xi1>, vector<2x8xf32>
    %cst_38 = arith.constant dense<0x7F800000> : vector<2xf32>
    %78 = vector.multi_reduction <minimumf>, %77, %cst_38 [1] : vector<2x8xf32> to vector<2xf32>
    %79 = vector.shape_cast %78 : vector<2xf32> to vector<2x1xf32>
    %80 = arith.fptosi %79 : vector<2x1xf32> to vector<2x1xi32>
    %c0_i32_39 = arith.constant 0 : i32
    %81 = vector.broadcast %c0_i32_39 : i32 to vector<2x128xi32>
    %82 = arith.cmpi eq, %70, %81 : vector<2x128xi32>
    %83 = vector.shape_cast %80 : vector<2x1xi32> to vector<2x1xi32>
    %84 = vector.broadcast %83 : vector<2x1xi32> to vector<2x128xi32>
    %85 = arith.select %82, %84, %71 : vector<2x128xi1>, vector<2x128xi32>
    %86 = vector.broadcast %80 : vector<2x1xi32> to vector<2x8xi32>
    %87 = arith.cmpi eq, %68, %86 : vector<2x8xi32>
    %cst_40 = arith.constant -2.000000e+38 : f32
    %88 = vector.broadcast %cst_40 : f32 to vector<2x8xf32>
    %89 = arith.select %87, %88, %66 : vector<2x8xi1>, vector<2x8xf32>
    %cst_41 = arith.constant dense<0xFF800000> : vector<2xf32>
    %90 = vector.multi_reduction <maximumf>, %89, %cst_41 [1] : vector<2x8xf32> to vector<2xf32>
    %91 = vector.shape_cast %90 : vector<2xf32> to vector<2x1xf32>
    %92 = vector.broadcast %91 : vector<2x1xf32> to vector<2x8xf32>
    %93 = arith.cmpf oeq, %89, %92 : vector<2x8xf32>
    %cst_42 = arith.constant 8.000000e+00 : f32
    %94 = vector.broadcast %cst_42 : f32 to vector<2x8xf32>
    %95 = arith.select %93, %69, %94 : vector<2x8xi1>, vector<2x8xf32>
    %cst_43 = arith.constant dense<0x7F800000> : vector<2xf32>
    %96 = vector.multi_reduction <minimumf>, %95, %cst_43 [1] : vector<2x8xf32> to vector<2xf32>
    %97 = vector.shape_cast %96 : vector<2xf32> to vector<2x1xf32>
    %98 = arith.fptosi %97 : vector<2x1xf32> to vector<2x1xi32>
    %c1_i32 = arith.constant 1 : i32
    %99 = vector.broadcast %c1_i32 : i32 to vector<2x128xi32>
    %100 = arith.cmpi eq, %70, %99 : vector<2x128xi32>
    %101 = vector.shape_cast %98 : vector<2x1xi32> to vector<2x1xi32>
    %102 = vector.broadcast %101 : vector<2x1xi32> to vector<2x128xi32>
    %103 = arith.select %100, %102, %85 : vector<2x128xi1>, vector<2x128xi32>
    %104 = vector.broadcast %98 : vector<2x1xi32> to vector<2x8xi32>
    %105 = arith.cmpi eq, %68, %104 : vector<2x8xi32>
    %cst_44 = arith.constant -2.000000e+38 : f32
    %106 = vector.broadcast %cst_44 : f32 to vector<2x8xf32>
    %107 = arith.select %105, %106, %89 : vector<2x8xi1>, vector<2x8xf32>
    %cst_45 = arith.constant dense<0xFF800000> : vector<2xf32>
    %108 = vector.multi_reduction <maximumf>, %107, %cst_45 [1] : vector<2x8xf32> to vector<2xf32>
    %109 = vector.shape_cast %108 : vector<2xf32> to vector<2x1xf32>
    %110 = vector.broadcast %109 : vector<2x1xf32> to vector<2x8xf32>
    %111 = arith.cmpf oeq, %107, %110 : vector<2x8xf32>
    %cst_46 = arith.constant 8.000000e+00 : f32
    %112 = vector.broadcast %cst_46 : f32 to vector<2x8xf32>
    %113 = arith.select %111, %69, %112 : vector<2x8xi1>, vector<2x8xf32>
    %cst_47 = arith.constant dense<0x7F800000> : vector<2xf32>
    %114 = vector.multi_reduction <minimumf>, %113, %cst_47 [1] : vector<2x8xf32> to vector<2xf32>
    %115 = vector.shape_cast %114 : vector<2xf32> to vector<2x1xf32>
    %116 = arith.fptosi %115 : vector<2x1xf32> to vector<2x1xi32>
    %c2_i32 = arith.constant 2 : i32
    %117 = vector.broadcast %c2_i32 : i32 to vector<2x128xi32>
    %118 = arith.cmpi eq, %70, %117 : vector<2x128xi32>
    %119 = vector.shape_cast %116 : vector<2x1xi32> to vector<2x1xi32>
    %120 = vector.broadcast %119 : vector<2x1xi32> to vector<2x128xi32>
    %121 = arith.select %118, %120, %103 : vector<2x128xi1>, vector<2x128xi32>
    %122 = vector.broadcast %116 : vector<2x1xi32> to vector<2x8xi32>
    %123 = arith.cmpi eq, %68, %122 : vector<2x8xi32>
    %cst_48 = arith.constant -2.000000e+38 : f32
    %124 = vector.broadcast %cst_48 : f32 to vector<2x8xf32>
    %125 = arith.select %123, %124, %107 : vector<2x8xi1>, vector<2x8xf32>
    %cst_49 = arith.constant dense<0xFF800000> : vector<2xf32>
    %126 = vector.multi_reduction <maximumf>, %125, %cst_49 [1] : vector<2x8xf32> to vector<2xf32>
    %127 = vector.shape_cast %126 : vector<2xf32> to vector<2x1xf32>
    %128 = vector.broadcast %127 : vector<2x1xf32> to vector<2x8xf32>
    %129 = arith.cmpf oeq, %125, %128 : vector<2x8xf32>
    %cst_50 = arith.constant 8.000000e+00 : f32
    %130 = vector.broadcast %cst_50 : f32 to vector<2x8xf32>
    %131 = arith.select %129, %69, %130 : vector<2x8xi1>, vector<2x8xf32>
    %cst_51 = arith.constant dense<0x7F800000> : vector<2xf32>
    %132 = vector.multi_reduction <minimumf>, %131, %cst_51 [1] : vector<2x8xf32> to vector<2xf32>
    %133 = vector.shape_cast %132 : vector<2xf32> to vector<2x1xf32>
    %134 = arith.fptosi %133 : vector<2x1xf32> to vector<2x1xi32>
    %c3_i32 = arith.constant 3 : i32
    %135 = vector.broadcast %c3_i32 : i32 to vector<2x128xi32>
    %136 = arith.cmpi eq, %70, %135 : vector<2x128xi32>
    %137 = vector.shape_cast %134 : vector<2x1xi32> to vector<2x1xi32>
    %138 = vector.broadcast %137 : vector<2x1xi32> to vector<2x128xi32>
    %139 = arith.select %136, %138, %121 : vector<2x128xi1>, vector<2x128xi32>
    %c0_52 = arith.constant 0 : index
    %c0_53 = arith.constant 0 : index
    %140 = vector.load %arg7[%c0_52, %c0_53] : memref<2x128xi32, #tpu.memory_space<vmem>>, vector<2x128xi32>
    tpu.vector_store %arg7[%c0_52, %c0_53], %139 {strides = array<i32>} : memref<2x128xi32, #tpu.memory_space<vmem>>, vector<2x128xi32>,
    return
  }
}

</mosaic_0001>

<llo_original>
// kernel: dqn_policy_forward.1
$region0: #{dqn_policy_forward.1}
  #allocation0 [shape = 'u32[]', space=smem, size = 0x4, offset = 0x4, fixed_abs, tag = 'smem constant byte address 0x4 - core index']
  #allocation1 [shape = 'u32[72,128]{1,0:T(1,128)}', space=vmem, size = 0x9000, scoped, tag = 'internal scratch']
  %s0 = inlined_call_operand.vmem [shape: f32[2,8,8], index: 0, kind: input, shape index: {}]
  %s1 = inlined_call_operand.vmem [shape: f32[16,8], index: 1, kind: input, shape index: {}]
  %s2 = inlined_call_operand.vmem [shape: f32[9,128], index: 2, kind: input, shape index: {}]
  %s3 = inlined_call_operand.vmem [shape: f32[128,128], index: 3, kind: input, shape index: {}]
  %s4 = inlined_call_operand.vmem [shape: f32[129,64], index: 4, kind: input, shape index: {}]
  %s5 = inlined_call_operand.vmem [shape: f32[65,64], index: 5, kind: input, shape index: {}]
  %s6 = inlined_call_operand.vmem [shape: f32[65,8], index: 6, kind: input, shape index: {}]
  %s7 = inlined_call_operand.hbm [shape: s32[2,128], index: 7, kind: output, shape index: {0}]
  %s8 = inlined_call_operand.hbm [shape: f32[2,8], index: 8, kind: output, shape index: {1}]
  %9 = xla_tuple %s7, %s8
  %s10 = sld [smem:[#allocation0]]
  $region46: #{dqn_policy_forward.1} parent=0
    _
  %s12 = ssub.s32 1, %s10
  %s13 = scalar_select 0, %s12, %s10
  $region1: #{dqn_policy_forward.1} parent=0
    #allocation2 [shape = 'u8[1024]{0}', space=vmem, size = 0x400, scoped, tag = 'output window, operand 0, single buffered']
    #allocation3 [shape = 's32[1]{0}', space=sflag, size = 0x4, scoped, tag = 'scoped memory for dqn_policy_forward.1']
    #allocation4 [shape = 'u8[1024]{0}', space=vmem, size = 0x400, scoped, tag = 'output window, operand 1, single buffered']
    #allocation5 [shape = 's32[1]{0}', space=sflag, size = 0x4, scoped, tag = 'scoped memory for dqn_policy_forward.1']
    %14 = vsyncpa [#allocation3], 0
    %15 = vsyncpa [#allocation5], 0
    // Predicated region
    $region2: #{dqn_policy_forward.1} parent=1 // pred_check
      _
    $region3: #{dqn_policy_forward.1} parent=1 // pred_check_branch
      %17 = sbr.rel (0) target = $region5
    $region4: #{dqn_policy_forward.1} parent=1 // pred_region
      _
    $region5: #{dqn_policy_forward.1} parent=1 // pred_fallthru
      _
    // Predicated region
    $region6: #{dqn_policy_forward.1} parent=1 // pred_check
      _
    $region7: #{dqn_policy_forward.1} parent=1 // pred_check_branch
      %19 = sbr.rel (0) target = $region9
    $region8: #{dqn_policy_forward.1} parent=1 // pred_region
      _
    $region9: #{dqn_policy_forward.1} parent=1 // pred_fallthru
      _
    // Predicated region
    $region10: #{dqn_policy_forward.1} parent=1 // pred_check
      _
    $region11: #{dqn_policy_forward.1} parent=1 // pred_check_branch
      %21 = sbr.rel (0) target = $region13
    $region12: #{dqn_policy_forward.1} parent=1 // pred_region
      _
    $region13: #{dqn_policy_forward.1} parent=1 // pred_fallthru
      _
    // Predicated region
    $region14: #{dqn_policy_forward.1} parent=1 // pred_check
      _
    $region15: #{dqn_policy_forward.1} parent=1 // pred_check_branch
      %23 = sbr.rel (0) target = $region17
    $region16: #{dqn_policy_forward.1} parent=1 // pred_region
      _
    $region17: #{dqn_policy_forward.1} parent=1 // pred_fallthru
      _
    // Predicated region
    $region18: #{dqn_policy_forward.1} parent=1 // pred_check
      _
    $region19: #{dqn_policy_forward.1} parent=1 // pred_check_branch
      %25 = sbr.rel (0) target = $region21
    $region20: #{dqn_policy_forward.1} parent=1 // pred_region
      _
    $region21: #{dqn_policy_forward.1} parent=1 // pred_fallthru
      _
    // Predicated region
    $region22: #{dqn_policy_forward.1} parent=1 // pred_check
      _
    $region23: #{dqn_policy_forward.1} parent=1 // pred_check_branch
      %27 = sbr.rel (0) target = $region25
    $region24: #{dqn_policy_forward.1} parent=1 // pred_region
      _
    $region25: #{dqn_policy_forward.1} parent=1 // pred_fallthru
      _
    // Predicated region
    $region26: #{dqn_policy_forward.1} parent=1 // pred_check
      _
    $region27: #{dqn_policy_forward.1} parent=1 // pred_check_branch
      %29 = sbr.rel (0) target = $region29
    $region28: #{dqn_policy_forward.1} parent=1 // pred_region
      _
    $region29: #{dqn_policy_forward.1} parent=1 // pred_fallthru
      _
    %v30 = vld [vmem:[%s2] sm:$0xff]
    %v31 = vld [vmem:[%s2 + $0x8] sm:$0x1]
    %v32 = vld [vmem:[%s1] sm:$0xff]
    %v33 = vld [vmem:[%s1 + $0x8] sm:$0xff]
    %v34 = vperm.slane %v31, 0
    %vm35 = vcmask 64512
    %v37 = vsel %vm35, %v32, 0
    %v40 = vsel %vm35, %v33, 0
    %42 = vmatpush.msra.mxu0 0.0
    %43 = vmatpush.msra.mxu0 0.0
    %44 = vmatpush.msra.mxu0 0.0
    %45 = vmatpush.msra.mxu0 0.0
    %46 = vmatpush.msra.mxu0 0.0
    %47 = vmatpush.msra.mxu0 0.0
    %48 = vmatpush.msra.mxu0 0.0
    %49 = vmatpush.msra.mxu0 0.0
    %50 = vmatpush.msra.mxu0 0.0
    %51 = vmatpush.msra.mxu0 0.0
    %52 = vmatpush.msra.mxu0 0.0
    %53 = vmatpush.msra.mxu0 0.0
    %54 = vmatpush.msra.mxu0 0.0
    %55 = vmatpush.msra.mxu0 0.0
    %56 = vmatpush.msra.mxu0 0.0
    %57 = vmatpush.msra.mxu0 %v30
    %58 = vmatmul.f32.gmra.mxu0 %v37
    %v59 = vpop.f32.mrf.mxu0
    %v60 = vadd.f32 %v34, %v59
    %61 = vmatmul.f32.gmra.mxu0 %v40
    %v62 = vpop.f32.mrf.mxu0
    %v63 = vadd.f32 %v34, %v62
    %64 = vdwg.mxu0
    %v65 = vld [vmem:[%s3] sm:$0xff]
    %v66 = vld [vmem:[%s3 + $0x8] sm:$0xff]
    %v67 = vld [vmem:[%s3 + $0x10] sm:$0xff]
    %v68 = vld [vmem:[%s3 + $0x18] sm:$0xff]
    %v69 = vld [vmem:[%s3 + $0x20] sm:$0xff]
    %v70 = vld [vmem:[%s3 + $0x28] sm:$0xff]
    %v71 = vld [vmem:[%s3 + $0x30] sm:$0xff]
    %v72 = vld [vmem:[%s3 + $0x38] sm:$0xff]
    %v73 = vld [vmem:[%s3 + $0x40] sm:$0xff]
    %v74 = vld [vmem:[%s3 + $0x48] sm:$0xff]
    %v75 = vld [vmem:[%s3 + $0x50] sm:$0xff]
    %v76 = vld [vmem:[%s3 + $0x58] sm:$0xff]
    %v77 = vld [vmem:[%s3 + $0x60] sm:$0xff]
    %v78 = vld [vmem:[%s3 + $0x68] sm:$0xff]
    %v79 = vld [vmem:[%s3 + $0x70] sm:$0xff]
    %v80 = vld [vmem:[%s3 + $0x78] sm:$0xff]
    %v81 = vtanh.pop %v60
    %82 = vmatpush.msra.mxu0 %v80
    %83 = vmatpush.msra.mxu0 %v79
    %84 = vmatpush.msra.mxu0 %v78
    %85 = vmatpush.msra.mxu0 %v77
    %86 = vmatpush.msra.mxu0 %v76
    %87 = vmatpush.msra.mxu0 %v75
    %88 = vmatpush.msra.mxu0 %v74
    %89 = vmatpush.msra.mxu0 %v73
    %90 = vmatpush.msra.mxu0 %v72
    %91 = vmatpush.msra.mxu0 %v71
    %92 = vmatpush.msra.mxu0 %v70
    %93 = vmatpush.msra.mxu0 %v69
    %94 = vmatpush.msra.mxu0 %v68
    %95 = vmatpush.msra.mxu0 %v67
    %96 = vmatpush.msra.mxu0 %v66
    %97 = vmatpush.msra.mxu0 %v65
    %98 = vmatmul.f32.gmra.mxu0 %v81
    %v99 = vpop.f32.mrf.mxu0
    %v100 = vadd.f32 0.0, %v99
    %101 = vdwg.mxu0
    %v103 = vrot.slane %v100, 6
    %v105 = vadd.f32 %v60, %v103
    %v106 = vtanh.pop %v105
    %v108 = vrot.slane %v106, 2
    %110 = vmatpush.msra.mxu0 %v80
    %111 = vmatpush.msra.mxu0 %v79
    %112 = vmatpush.msra.mxu0 %v78
    %113 = vmatpush.msra.mxu0 %v77
    %114 = vmatpush.msra.mxu0 %v76
    %115 = vmatpush.msra.mxu0 %v75
    %116 = vmatpush.msra.mxu0 %v74
    %117 = vmatpush.msra.mxu0 %v73
    %118 = vmatpush.msra.mxu0 %v72
    %119 = vmatpush.msra.mxu0 %v71
    %120 = vmatpush.msra.mxu0 %v70
    %121 = vmatpush.msra.mxu0 %v69
    %122 = vmatpush.msra.mxu0 %v68
    %123 = vmatpush.msra.mxu0 %v67
    %124 = vmatpush.msra.mxu0 %v66
    %125 = vmatpush.msra.mxu0 %v65
    %126 = vmatmul.f32.gmra.mxu0 %v108
    %v127 = vpop.f32.mrf.mxu0
    %v128 = vadd.f32 0.0, %v127
    %129 = vdwg.mxu0
    %v131 = vrot.slane %v128, 4
    %v133 = vadd.f32 %v60, %v131
    %v134 = vtanh.pop %v133
    %v136 = vrot.slane %v134, 4
    %138 = vmatpush.msra.mxu0 %v80
    %139 = vmatpush.msra.mxu0 %v79
    %140 = vmatpush.msra.mxu0 %v78
    %141 = vmatpush.msra.mxu0 %v77
    %142 = vmatpush.msra.mxu0 %v76
    %143 = vmatpush.msra.mxu0 %v75
    %144 = vmatpush.msra.mxu0 %v74
    %145 = vmatpush.msra.mxu0 %v73
    %146 = vmatpush.msra.mxu0 %v72
    %147 = vmatpush.msra.mxu0 %v71
    %148 = vmatpush.msra.mxu0 %v70
    %149 = vmatpush.msra.mxu0 %v69
    %150 = vmatpush.msra.mxu0 %v68
    %151 = vmatpush.msra.mxu0 %v67
    %152 = vmatpush.msra.mxu0 %v66
    %153 = vmatpush.msra.mxu0 %v65
    %154 = vmatmul.f32.gmra.mxu0 %v136
    %v155 = vpop.f32.mrf.mxu0
    %v156 = vadd.f32 0.0, %v155
    %157 = vdwg.mxu0
    %v159 = vrot.slane %v156, 2
    %v161 = vadd.f32 %v60, %v159
    %v162 = vtanh.pop %v161
    %v164 = vrot.slane %v162, 6
    %166 = vmatpush.msra.mxu0 %v80
    %167 = vmatpush.msra.mxu0 %v79
    %168 = vmatpush.msra.mxu0 %v78
    %169 = vmatpush.msra.mxu0 %v77
    %170 = vmatpush.msra.mxu0 %v76
    %171 = vmatpush.msra.mxu0 %v75
    %172 = vmatpush.msra.mxu0 %v74
    %173 = vmatpush.msra.mxu0 %v73
    %174 = vmatpush.msra.mxu0 %v72
    %175 = vmatpush.msra.mxu0 %v71
    %176 = vmatpush.msra.mxu0 %v70
    %177 = vmatpush.msra.mxu0 %v69
    %178 = vmatpush.msra.mxu0 %v68
    %179 = vmatpush.msra.mxu0 %v67
    %180 = vmatpush.msra.mxu0 %v66
    %181 = vmatpush.msra.mxu0 %v65
    %182 = vmatmul.f32.gmra.mxu0 %v164
    %v183 = vpop.f32.mrf.mxu0
    %v184 = vadd.f32 0.0, %v183
    %185 = vdwg.mxu0
    %v186 = vadd.f32 %v63, %v184
    %v187 = vtanh.pop %v186
    %188 = vmatpush.msra.mxu0 %v80
    %189 = vmatpush.msra.mxu0 %v79
    %190 = vmatpush.msra.mxu0 %v78
    %191 = vmatpush.msra.mxu0 %v77
    %192 = vmatpush.msra.mxu0 %v76
    %193 = vmatpush.msra.mxu0 %v75
    %194 = vmatpush.msra.mxu0 %v74
    %195 = vmatpush.msra.mxu0 %v73
    %196 = vmatpush.msra.mxu0 %v72
    %197 = vmatpush.msra.mxu0 %v71
    %198 = vmatpush.msra.mxu0 %v70
    %199 = vmatpush.msra.mxu0 %v69
    %200 = vmatpush.msra.mxu0 %v68
    %201 = vmatpush.msra.mxu0 %v67
    %202 = vmatpush.msra.mxu0 %v66
    %203 = vmatpush.msra.mxu0 %v65
    %204 = vmatmul.f32.gmra.mxu0 %v187
    %v205 = vpop.f32.mrf.mxu0
    %v206 = vadd.f32 0.0, %v205
    %207 = vdwg.mxu0
    %v209 = vrot.slane %v206, 6
    %v211 = vadd.f32 %v63, %v209
    %v212 = vtanh.pop %v211
    %v214 = vrot.slane %v212, 2
    %216 = vmatpush.msra.mxu0 %v80
    %217 = vmatpush.msra.mxu0 %v79
    %218 = vmatpush.msra.mxu0 %v78
    %219 = vmatpush.msra.mxu0 %v77
    %220 = vmatpush.msra.mxu0 %v76
    %221 = vmatpush.msra.mxu0 %v75
    %222 = vmatpush.msra.mxu0 %v74
    %223 = vmatpush.msra.mxu0 %v73
    %224 = vmatpush.msra.mxu0 %v72
    %225 = vmatpush.msra.mxu0 %v71
    %226 = vmatpush.msra.mxu0 %v70
    %227 = vmatpush.msra.mxu0 %v69
    %228 = vmatpush.msra.mxu0 %v68
    %229 = vmatpush.msra.mxu0 %v67
    %230 = vmatpush.msra.mxu0 %v66
    %231 = vmatpush.msra.mxu0 %v65
    %232 = vmatmul.f32.gmra.mxu0 %v214
    %v233 = vpop.f32.mrf.mxu0
    %v234 = vadd.f32 0.0, %v233
    %235 = vdwg.mxu0
    %v237 = vrot.slane %v234, 4
    %v239 = vadd.f32 %v63, %v237
    %v240 = vtanh.pop %v239
    %v242 = vrot.slane %v240, 4
    %244 = vmatpush.msra.mxu0 %v80
    %245 = vmatpush.msra.mxu0 %v79
    %246 = vmatpush.msra.mxu0 %v78
    %247 = vmatpush.msra.mxu0 %v77
    %248 = vmatpush.msra.mxu0 %v76
    %249 = vmatpush.msra.mxu0 %v75
    %250 = vmatpush.msra.mxu0 %v74
    %251 = vmatpush.msra.mxu0 %v73
    %252 = vmatpush.msra.mxu0 %v72
    %253 = vmatpush.msra.mxu0 %v71
    %254 = vmatpush.msra.mxu0 %v70
    %255 = vmatpush.msra.mxu0 %v69
    %256 = vmatpush.msra.mxu0 %v68
    %257 = vmatpush.msra.mxu0 %v67
    %258 = vmatpush.msra.mxu0 %v66
    %259 = vmatpush.msra.mxu0 %v65
    %260 = vmatmul.f32.gmra.mxu0 %v242
    %v261 = vpop.f32.mrf.mxu0
    %v262 = vadd.f32 0.0, %v261
    %263 = vdwg.mxu0
    %v265 = vrot.slane %v262, 2
    %v267 = vadd.f32 %v63, %v265
    %v268 = vtanh.pop %v267
    %v269 = vld [vmem:[%s4] sm:$0xff]
    %v270 = vld [vmem:[%s4 + $0x8] sm:$0xff]
    %v271 = vld [vmem:[%s4 + $0x10] sm:$0xff]
    %v272 = vld [vmem:[%s4 + $0x18] sm:$0xff]
    %v273 = vld [vmem:[%s4 + $0x20] sm:$0xff]
    %v274 = vld [vmem:[%s4 + $0x28] sm:$0xff]
    %v275 = vld [vmem:[%s4 + $0x30] sm:$0xff]
    %v276 = vld [vmem:[%s4 + $0x38] sm:$0xff]
    %v277 = vld [vmem:[%s4 + $0x40] sm:$0xff]
    %v278 = vld [vmem:[%s4 + $0x48] sm:$0xff]
    %v279 = vld [vmem:[%s4 + $0x50] sm:$0xff]
    %v280 = vld [vmem:[%s4 + $0x58] sm:$0xff]
    %v281 = vld [vmem:[%s4 + $0x60] sm:$0xff]
    %v282 = vld [vmem:[%s4 + $0x68] sm:$0xff]
    %v283 = vld [vmem:[%s4 + $0x70] sm:$0xff]
    %v284 = vld [vmem:[%s4 + $0x78] sm:$0xff]
    %v285 = vld [vmem:[%s4 + $0x80] sm:$0x1]
    %v286 = vperm.slane %v285, 0
    %v288 = vrot.slane %v268, 6
    %290 = vmatpush.msra.mxu0 %v284
    %291 = vmatpush.msra.mxu0 %v283
    %292 = vmatpush.msra.mxu0 %v282
    %293 = vmatpush.msra.mxu0 %v281
    %294 = vmatpush.msra.mxu0 %v280
    %295 = vmatpush.msra.mxu0 %v279
    %296 = vmatpush.msra.mxu0 %v278
    %297 = vmatpush.msra.mxu0 %v277
    %298 = vmatpush.msra.mxu0 %v276
    %299 = vmatpush.msra.mxu0 %v275
    %300 = vmatpush.msra.mxu0 %v274
    %301 = vmatpush.msra.mxu0 %v273
    %302 = vmatpush.msra.mxu0 %v272
    %303 = vmatpush.msra.mxu0 %v271
    %304 = vmatpush.msra.mxu0 %v270
    %305 = vmatpush.msra.mxu0 %v269
    %306 = vmatmul.f32.gmra.mxu0 %v288
    %v307 = vpop.f32.mrf.mxu0
    %v308 = vadd.f32 %v286, %v307
    %309 = vdwg.mxu0
    %v310 = vmax.f32 %v308, 0.0
    %v311 = vld [vmem:[%s5] sm:$0xff]
    %v312 = vld [vmem:[%s5 + $0x8] sm:$0xff]
    %v313 = vld [vmem:[%s5 + $0x10] sm:$0xff]
    %v314 = vld [vmem:[%s5 + $0x18] sm:$0xff]
    %v315 = vld [vmem:[%s5 + $0x20] sm:$0xff]
    %v316 = vld [vmem:[%s5 + $0x28] sm:$0xff]
    %v317 = vld [vmem:[%s5 + $0x30] sm:$0xff]
    %v318 = vld [vmem:[%s5 + $0x38] sm:$0xff]
    %v319 = vld [vmem:[%s5 + $0x40] sm:$0x1]
    %v320 = vperm.slane %v319, 0
    %vm321 = vcmask 523264
    %v323 = vsel %vm321, %v310, 0
    %325 = vmatpush.msra.mxu0 0.0
    %326 = vmatpush.msra.mxu0 0.0
    %327 = vmatpush.msra.mxu0 0.0
    %328 = vmatpush.msra.mxu0 0.0
    %329 = vmatpush.msra.mxu0 0.0
    %330 = vmatpush.msra.mxu0 0.0
    %331 = vmatpush.msra.mxu0 0.0
    %332 = vmatpush.msra.mxu0 0.0
    %333 = vmatpush.msra.mxu0 %v318
    %334 = vmatpush.msra.mxu0 %v317
    %335 = vmatpush.msra.mxu0 %v316
    %336 = vmatpush.msra.mxu0 %v315
    %337 = vmatpush.msra.mxu0 %v314
    %338 = vmatpush.msra.mxu0 %v313
    %339 = vmatpush.msra.mxu0 %v312
    %340 = vmatpush.msra.mxu0 %v311
    %341 = vmatmul.f32.gmra.mxu0 %v323
    %v342 = vpop.f32.mrf.mxu0
    %v343 = vadd.f32 %v320, %v342
    %344 = vdwg.mxu0
    %v345 = vmax.f32 %v343, 0.0
    %v346 = vld [vmem:[%s6] sm:$0xff]
    %v347 = vld [vmem:[%s6 + $0x8] sm:$0xff]
    %v348 = vld [vmem:[%s6 + $0x10] sm:$0xff]
    %v349 = vld [vmem:[%s6 + $0x18] sm:$0xff]
    %v350 = vld [vmem:[%s6 + $0x20] sm:$0xff]
    %v351 = vld [vmem:[%s6 + $0x28] sm:$0xff]
    %v352 = vld [vmem:[%s6 + $0x30] sm:$0xff]
    %v353 = vld [vmem:[%s6 + $0x38] sm:$0xff]
    %v354 = vld [vmem:[%s6 + $0x40] sm:$0x1]
    %v355 = vperm.slane %v354, 0
    %v357 = vsel %vm321, %v345, 0
    %359 = vmatpush.msra.mxu0 0.0
    %360 = vmatpush.msra.mxu0 0.0
    %361 = vmatpush.msra.mxu0 0.0
    %362 = vmatpush.msra.mxu0 0.0
    %363 = vmatpush.msra.mxu0 0.0
    %364 = vmatpush.msra.mxu0 0.0
    %365 = vmatpush.msra.mxu0 0.0
    %366 = vmatpush.msra.mxu0 0.0
    %367 = vmatpush.msra.mxu0 %v353
    %368 = vmatpush.msra.mxu0 %v352
    %369 = vmatpush.msra.mxu0 %v351
    %370 = vmatpush.msra.mxu0 %v350
    %371 = vmatpush.msra.mxu0 %v349
    %372 = vmatpush.msra.mxu0 %v348
    %373 = vmatpush.msra.mxu0 %v347
    %374 = vmatpush.msra.mxu0 %v346
    %375 = vmatmul.f32.gmra.mxu0 %v357
    %v376 = vpop.f32.mrf.mxu0
    %v377 = vadd.f32 %v355, %v376
    %378 = vdwg.mxu0
    %v379 = vld [vmem:[%s0] sm:$0xff]
    %v380 = vand.u32 2147483647, %v379
    %v381 = vsel %vm35, %v380, -inf
    %v382 = vrot.slane %v381, 4
    %v383 = vmax.f32 %v381, %v382
    %v384 = vrot.slane %v383, 2
    %v385 = vmax.f32 %v383, %v384
    %v386 = vrot.slane %v385, 1
    %v387 = vmax.f32 %v385, %v386
    %vm388 = vcmp.gt.f32.partialorder %v387, 0.0
    %v389 = vsel %vm388, 1, 0
    %vm390 = vcmp.eq.s32.totalorder %v389, 1
    %v391 = vsel %vm390, %v377, -1e+38
    %vm392 = vcmask 58368
    %393 = vst.msk [vmem:[#allocation4] sm:$0x3] %vm392, %v391
    %v394 = vlaneseq
    %v395 = vand.u32 %v394, 127
    %v396 = vcvt.s32.f32 %v395
    %v397 = vsel %vm392, %v391, -inf
    %398 = vmax.xlane.f32.xlu0 %v397
    %v399 = vpop.xlane.xlu0 %398
    %vm400 = vcmp.eq.f32.partialorder %v391, %v399
    %v401 = vsel %vm400, %v396, 8.0
    %v402 = vsel %vm392, %v401, inf
    %403 = vmin.xlane.f32.xlu0 %v402
    %v404 = vpop.xlane.xlu0 %403
    %v405 = vcvt.f32.s32.to.zero.pseudo %v404
    %vm406 = vcmp.eq.s32.totalorder %v395, 0
    %v407 = vsel %vm406, %v405, 0
    %vm408 = vcmp.eq.s32.totalorder %v395, %v405
    %v409 = vsel %vm408, -2e+38, %v391
    %v410 = vsel %vm392, %v409, -inf
    %411 = vmax.xlane.f32.xlu0 %v410
    %v412 = vpop.xlane.xlu0 %411
    %vm413 = vcmp.eq.f32.partialorder %v409, %v412
    %v414 = vsel %vm413, %v396, 8.0
    %v415 = vsel %vm392, %v414, inf
    %416 = vmin.xlane.f32.xlu0 %v415
    %v417 = vpop.xlane.xlu0 %416
    %v418 = vcvt.f32.s32.to.zero.pseudo %v417
    %vm419 = vcmp.eq.s32.totalorder %v395, 1
    %v420 = vsel %vm419, %v418, %v407
    %vm421 = vcmp.eq.s32.totalorder %v395, %v418
    %v422 = vsel %vm421, -2e+38, %v409
    %v423 = vsel %vm392, %v422, -inf
    %424 = vmax.xlane.f32.xlu0 %v423
    %v425 = vpop.xlane.xlu0 %424
    %vm426 = vcmp.eq.f32.partialorder %v422, %v425
    %v427 = vsel %vm426, %v396, 8.0
    %v428 = vsel %vm392, %v427, inf
    %429 = vmin.xlane.f32.xlu0 %v428
    %v430 = vpop.xlane.xlu0 %429
    %v431 = vcvt.f32.s32.to.zero.pseudo %v430
    %vm432 = vcmp.eq.s32.totalorder %v395, 2
    %v433 = vsel %vm432, %v431, %v420
    %vm434 = vcmp.eq.s32.totalorder %v395, %v431
    %v435 = vsel %vm434, -2e+38, %v422
    %v436 = vsel %vm392, %v435, -inf
    %437 = vmax.xlane.f32.xlu0 %v436
    %v438 = vpop.xlane.xlu0 %437
    %vm439 = vcmp.eq.f32.partialorder %v435, %v438
    %v440 = vsel %vm439, %v396, 8.0
    %v441 = vsel %vm392, %v440, inf
    %442 = vmin.xlane.f32.xlu0 %v441
    %v443 = vpop.xlane.xlu0 %442
    %v444 = vcvt.f32.s32.to.zero.pseudo %v443
    %vm445 = vcmp.eq.s32.totalorder %v395, 3
    %v446 = vsel %vm445, %v444, %v433
    %447 = vst [vmem:[#allocation2] sm:$0x3] %v446
    // Predicated region
    $region30: #{dqn_policy_forward.1} parent=1 // pred_check
      _
    $region31: #{dqn_policy_forward.1} parent=1 // pred_check_branch
      %449 = sbr.rel (0) target = $region33
    $region32: #{dqn_policy_forward.1} parent=1 // pred_region
      %451 = vsyncadd [#allocation3], 0
      %s453 = sshll.u32 [#allocation2], 4
      %s454 = int_to_ptr.vmem [resolvable:$true] %s453
      %s455 = sshll.u32 %s7, 4
      %s456 = int_to_ptr.hbm [resolvable:$true] %s455
      %458 = dma.vmem_to_hbm [thread:$0]  %s454, 32, %s456, [#allocation3]
    $region33: #{dqn_policy_forward.1} parent=1 // pred_fallthru
      _
    // Predicated region
    $region34: #{dqn_policy_forward.1} parent=1 // pred_check
      _
    $region35: #{dqn_policy_forward.1} parent=1 // pred_check_branch
      %460 = sbr.rel (0) target = $region37
    $region36: #{dqn_policy_forward.1} parent=1 // pred_region
      %462 = vsyncadd [#allocation5], 0
      %s464 = sshll.u32 [#allocation4], 4
      %s465 = int_to_ptr.vmem [resolvable:$true] %s464
      %s466 = sshll.u32 %s8, 4
      %s467 = int_to_ptr.hbm [resolvable:$true] %s466
      %469 = dma.vmem_to_hbm [thread:$0]  %s465, 32, %s467, [#allocation5]
    $region37: #{dqn_policy_forward.1} parent=1 // pred_fallthru
      _
    // Predicated region
    $region38: #{dqn_policy_forward.1} parent=1 // pred_check
      _
    $region39: #{dqn_policy_forward.1} parent=1 // pred_check_branch
      %471 = sbr.rel (0) target = $region41
    $region40: #{dqn_policy_forward.1} parent=1 // pred_region
      %473 = dma.done [#allocation3], 32
    $region41: #{dqn_policy_forward.1} parent=1 // pred_fallthru
      _
    // Predicated region
    $region42: #{dqn_policy_forward.1} parent=1 // pred_check
      _
    $region43: #{dqn_policy_forward.1} parent=1 // pred_check_branch
      %475 = sbr.rel (0) target = $region45
    $region44: #{dqn_policy_forward.1} parent=1 // pred_region
      %477 = dma.done [#allocation5], 32
    $region45: #{dqn_policy_forward.1} parent=1 // pred_fallthru
      _
    %478 = vsyncpa [#allocation3], 1
    %479 = vsyncpa [#allocation5], 1

</llo_original>
